<compile_context>
chip_gen: v7x
topology: tpu7x:2x2x1
jax: 0.10.0
libtpu: 0.0.40
codegen_flags: <defaults>
</compile_context>

<pallas_src>
import jax
import jax.numpy as jnp
from jax.experimental import pallas as pl
from jax.experimental.pallas import tpu as pltpu

_LANE = 128


def _weightsum_kernel(rgb_ref, nir_ref, out_ref):
    # Elementwise weighted sum on the current VMEM tile. Compute in f32
    # (VPU has ample slack on an HBM-bound op), cast back to output dtype.
    rgb = rgb_ref[...].astype(jnp.float32)
    nir = nir_ref[...].astype(jnp.float32)
    out_ref[...] = (rgb * 0.25 + nir * 0.75).astype(out_ref.dtype)


def _sublane_pack(dtype):
    # Native sublane packing: (8,128) for 4-byte, (16,128) bf16/f16, (32,128) 8-bit.
    return {4: 8, 2: 16, 1: 32}.get(jnp.dtype(dtype).itemsize, 8)


def _num_tensorcores():
    # Only v7x exposes 2 TensorCores per chip to a single Pallas call.
    try:
        kind = (getattr(jax.devices()[0], "device_kind", "") or "").lower()
        if "v7" in kind:
            return 2
    except Exception:
        pass
    return 1


def _round_up(x, m):
    return -(-x // m) * m


def _run_flat(rgb_flat, nir_flat, *, target_tile_bytes=2 << 20, max_lane_mult=16):
    """Weighted sum of two 1-D arrays whose length is a multiple of 128."""
    n = rgb_flat.shape[0]
    dtype = rgb_flat.dtype
    itemsize = jnp.dtype(dtype).itemsize
    sub = _sublane_pack(dtype)
    assert n % _LANE == 0

    # Widest lane-dense last dim (multiple of 128, up to 128*max_lane_mult)
    # dividing n; prefer one whose row count is sublane-aligned (unmasked vst).
    best, best_aligned = None, None
    for k in range(max_lane_mult, 0, -1):
        w = _LANE * k
        if n % w:
            continue
        if best is None:
            best = w
        if best_aligned is None and (n // w) % sub == 0:
            best_aligned = w
    width = best_aligned if best_aligned is not None else best
    rows = n // width

    # ~2 MiB per buffer, rounded to the native sublane pack; the last block
    # may be ragged (Pallas masks it), so no divisor search is needed.
    target_rows = max(sub, (target_tile_bytes // (width * itemsize)) // sub * sub)
    tile_rows = min(target_rows, _round_up(rows, sub))

    # Grid shaping for multi-TC chips (v7x): give each core several
    # double-buffered steps and an even split; neutral on single-TC v5e/v6e.
    num_tc = _num_tensorcores()
    if num_tc >= 2 and rows > sub:
        min_steps = 4 * num_tc
        max_tile = max(sub, _round_up(pl.cdiv(rows, min_steps), sub))
        tile_rows = min(tile_rows, max_tile)
        steps = pl.cdiv(rows, tile_rows)
        if steps > 1 and steps % num_tc:
            t = tile_rows - sub
            lo = max(sub, tile_rows // 2)
            while t >= lo:
                if pl.cdiv(rows, t) % num_tc == 0:
                    tile_rows = t
                    break
                t -= sub

    grid = (pl.cdiv(rows, tile_rows),)

    rgb2d = rgb_flat.reshape(rows, width)
    nir2d = nir_flat.reshape(rows, width)

    out2d = pl.pallas_call(
        _weightsum_kernel,
        out_shape=jax.ShapeDtypeStruct((rows, width), dtype),
        grid_spec=pltpu.PrefetchScalarGridSpec(
            num_scalar_prefetch=0,
            grid=grid,
            in_specs=[
                pl.BlockSpec((tile_rows, width), lambda i: (i, 0)),
                pl.BlockSpec((tile_rows, width), lambda i: (i, 0)),
            ],
            out_specs=pl.BlockSpec((tile_rows, width), lambda i: (i, 0)),
        ),
        compiler_params=pltpu.CompilerParams(
            dimension_semantics=("parallel",),
        ),
        cost_estimate=pl.CostEstimate(
            flops=2 * n, transcendentals=0, bytes_accessed=3 * n * itemsize),
    )(rgb2d, nir2d)

    return out2d.reshape(-1)


def weightsum_fusion(rgb, nir, *, target_tile_bytes=2 << 20):
    """out = rgb * 0.25 + nir * 0.75, computed with a Pallas TPU kernel."""
    assert rgb.shape == nir.shape and rgb.dtype == nir.dtype
    assert jnp.issubdtype(rgb.dtype, jnp.floating), (
        "WeightsumFusion kernel expects floating-point inputs")

    orig_shape = rgb.shape
    total = rgb.size
    if total == 0:
        return rgb

    rgb_flat = rgb.reshape(-1)
    nir_flat = nir.reshape(-1)

    # The 128-aligned prefix runs through the kernel with no padding/copies;
    # the <128-element tail (rare) is a tiny plain-JAX epilogue.
    main = (total // _LANE) * _LANE

    if main == total:
        out_flat = _run_flat(rgb_flat, nir_flat,
                             target_tile_bytes=target_tile_bytes)
    elif main == 0:
        # Fewer than 128 elements: a kernel launch buys nothing here.
        out_flat = (rgb_flat.astype(jnp.float32) * 0.25
                    + nir_flat.astype(jnp.float32) * 0.75).astype(rgb.dtype)
    else:
        out_main = _run_flat(rgb_flat[:main], nir_flat[:main],
                             target_tile_bytes=target_tile_bytes)
        out_tail = (rgb_flat[main:].astype(jnp.float32) * 0.25
                    + nir_flat[main:].astype(jnp.float32) * 0.75).astype(rgb.dtype)
        out_flat = jnp.concatenate([out_main, out_tail])

    return out_flat.reshape(orig_shape)


if __name__ == "__main__":
    key = jax.random.PRNGKey(0)
    k_rgb, k_nir = jax.random.split(key)
    # Small NCHW shapes consistent with the module: batch=2, channels=4, 16x16.
    rgb = jax.random.normal(k_rgb, (2, 4, 16, 16), dtype=jnp.float32)
    nir = jax.random.normal(k_nir, (2, 4, 16, 16), dtype=jnp.float32)

    out = weightsum_fusion(rgb, nir)
    out = jax.block_until_ready(out)

    # Reference check (plain JAX).
    ref = rgb * 0.25 + nir * 0.75
    assert out.shape == rgb.shape and out.dtype == rgb.dtype
    assert jnp.allclose(out, ref, atol=1e-6, rtol=1e-6)

    print("KERNEL_OK")
</pallas_src>

<mosaic_0001>
module attributes {stable_mosaic.version = 11 : i64} {
  func.func @_weightsum_kernel(%arg0: i32, %arg1: memref<8x256xf32, #tpu.memory_space<vmem>>, %arg2: memref<8x256xf32, #tpu.memory_space<vmem>>, %arg3: memref<8x256xf32, #tpu.memory_space<vmem>>) attributes {dimension_semantics = [#tpu.dimension_semantics<parallel>], iteration_bounds = array<i64: 1>, scalar_prefetch = 0 : i64, scratch_operands = 0 : i64, tpu.core_type = #tpu.core_type<tc>, window_params = [{transform_indices = @transform_0, window_bounds = array<i64: 8, 256>}, {transform_indices = @transform_1, window_bounds = array<i64: 8, 256>}, {transform_indices = @transform_2, window_bounds = array<i64: 8, 256>}]} {
    %c0 = arith.constant 0 : index
    %c0_0 = arith.constant 0 : index
    %0 = vector.load %arg1[%c0, %c0_0] : memref<8x256xf32, #tpu.memory_space<vmem>>, vector<8x256xf32>
    %c0_1 = arith.constant 0 : index
    %c0_2 = arith.constant 0 : index
    %1 = vector.load %arg2[%c0_1, %c0_2] : memref<8x256xf32, #tpu.memory_space<vmem>>, vector<8x256xf32>
    %cst = arith.constant 2.500000e-01 : f32
    %2 = vector.broadcast %cst : f32 to vector<8x256xf32>
    %3 = arith.mulf %0, %2 : vector<8x256xf32>
    %cst_3 = arith.constant 7.500000e-01 : f32
    %4 = vector.broadcast %cst_3 : f32 to vector<8x256xf32>
    %5 = arith.mulf %1, %4 : vector<8x256xf32>
    %6 = arith.addf %3, %5 : vector<8x256xf32>
    %c0_4 = arith.constant 0 : index
    %c0_5 = arith.constant 0 : index
    %7 = vector.load %arg3[%c0_4, %c0_5] : memref<8x256xf32, #tpu.memory_space<vmem>>, vector<8x256xf32>
    tpu.vector_store %arg3[%c0_4, %c0_5], %6 {strides = array<i32>} : memref<8x256xf32, #tpu.memory_space<vmem>>, vector<8x256xf32>,
    return
  }
  func.func @transform_0(%arg0: i32) -> (i32, i32) {
    %c0_i32 = arith.constant 0 : i32
    %c0_i32_0 = arith.constant 0 : i32
    return %arg0, %c0_i32 : i32, i32
  }
  func.func @transform_1(%arg0: i32) -> (i32, i32) {
    %c0_i32 = arith.constant 0 : i32
    %c0_i32_0 = arith.constant 0 : i32
    return %arg0, %c0_i32 : i32, i32
  }
  func.func @transform_2(%arg0: i32) -> (i32, i32) {
    %c0_i32 = arith.constant 0 : i32
    %c0_i32_0 = arith.constant 0 : i32
    return %arg0, %c0_i32 : i32, i32
  }
}

</mosaic_0001>

<llo_original>
// kernel: tpu_custom_call.1
$region0: #{tpu_custom_call.1}
  #allocation0 [shape = 'u32[]', space=smem, size = 0x4, offset = 0x4, fixed_abs, tag = 'smem constant byte address 0x4 - core index']
  #allocation1 [shape = 'u32[144,128]{1,0:T(1,128)}', space=vmem, size = 0x12000, scoped, tag = 'internal scratch']
  %s0 = inlined_call_operand.hbm [shape: f32[8,256], index: 0, kind: input, shape index: {}]
  %s1 = inlined_call_operand.hbm [shape: f32[8,256], index: 1, kind: input, shape index: {}]
  %s2 = inlined_call_operand.hbm [shape: f32[8,256], index: 2, kind: output, shape index: {}]
  %s3 = sld [smem:[#allocation0]]
  $region26: #{tpu_custom_call.1} parent=0
    _
  %s5 = ssub.s32 1, %s3
  %s6 = scalar_select 0, %s5, %s3
  $region1: #{tpu_custom_call.1} parent=0
    #allocation2 [shape = 'u8[8192]{0}', space=vmem, size = 0x2000, scoped, tag = 'input window, operand 0, single buffered']
    #allocation3 [shape = 's32[1]{0}', space=sflag, size = 0x4, scoped, tag = 'scoped memory for tpu_custom_call.1']
    #allocation4 [shape = 's32[1]{0}', space=sflag, size = 0x4, scoped, tag = 'scoped memory for tpu_custom_call.1']
    #allocation5 [shape = 'u8[8192]{0}', space=vmem, size = 0x2000, scoped, tag = 'input window, operand 1, single buffered']
    #allocation6 [shape = 's32[1]{0}', space=sflag, size = 0x4, scoped, tag = 'scoped memory for tpu_custom_call.1']
    #allocation7 [shape = 'u8[8192]{0}', space=vmem, size = 0x2000, scoped, tag = 'output window, operand 0, single buffered']
    %7 = vsyncpa [#allocation3], 0
    %8 = vsyncpa [#allocation6], 0
    %9 = vsyncpa [#allocation4], 0
    // Predicated region
    $region2: #{tpu_custom_call.1} parent=1 // pred_check
      _
    $region3: #{tpu_custom_call.1} parent=1 // pred_check_branch
      %11 = sbr.rel (0) target = $region5
    $region4: #{tpu_custom_call.1} parent=1 // pred_region
      %s13 = ssub.s32 256, 256
      %14 = vsyncadd [#allocation3], %s13
      %s16 = sshll.u32 [#allocation2], 4
      %s17 = int_to_ptr.vmem [resolvable:$true] %s16
      %19 = dma.hbm_to_vmem [thread:$0]  %s0, 256, %s17, [#allocation3]
    $region5: #{tpu_custom_call.1} parent=1 // pred_fallthru
      _
    // Predicated region
    $region6: #{tpu_custom_call.1} parent=1 // pred_check
      _
    $region7: #{tpu_custom_call.1} parent=1 // pred_check_branch
      %21 = sbr.rel (0) target = $region9
    $region8: #{tpu_custom_call.1} parent=1 // pred_region
      %s23 = ssub.s32 256, 256
      %24 = vsyncadd [#allocation6], %s23
      %s26 = sshll.u32 [#allocation5], 4
      %s27 = int_to_ptr.vmem [resolvable:$true] %s26
      %29 = dma.hbm_to_vmem [thread:$0]  %s1, 256, %s27, [#allocation6]
    $region9: #{tpu_custom_call.1} parent=1 // pred_fallthru
      _
    // Predicated region
    $region10: #{tpu_custom_call.1} parent=1 // pred_check
      _
    $region11: #{tpu_custom_call.1} parent=1 // pred_check_branch
      %31 = sbr.rel (0) target = $region13
    $region12: #{tpu_custom_call.1} parent=1 // pred_region
      %32 = dma.done [#allocation3], 256
    $region13: #{tpu_custom_call.1} parent=1 // pred_fallthru
      _
    // Predicated region
    $region14: #{tpu_custom_call.1} parent=1 // pred_check
      _
    $region15: #{tpu_custom_call.1} parent=1 // pred_check_branch
      %34 = sbr.rel (0) target = $region17
    $region16: #{tpu_custom_call.1} parent=1 // pred_region
      %35 = dma.done [#allocation6], 256
    $region17: #{tpu_custom_call.1} parent=1 // pred_fallthru
      _
    %v36 = vld [vmem:[#allocation2] sm:$0xff]
    %v37 = vld [vmem:[#allocation2 + $0x8] sm:$0xff]
    %v38 = vld [vmem:[#allocation5] sm:$0xff]
    %v39 = vld [vmem:[#allocation5 + $0x8] sm:$0xff]
    %v40 = vmul.f32 %v36, 0.25
    %v41 = vmul.f32 %v37, 0.25
    %v42 = vmul.f32 %v38, 0.75
    %v43 = vmul.f32 %v39, 0.75
    %v44 = vadd.f32 %v40, %v42
    %v45 = vadd.f32 %v41, %v43
    %46 = vst [vmem:[#allocation7] sm:$0xff] %v44
    %47 = vst [vmem:[#allocation7 + $0x8] sm:$0xff] %v45
    // Predicated region
    $region18: #{tpu_custom_call.1} parent=1 // pred_check
      _
    $region19: #{tpu_custom_call.1} parent=1 // pred_check_branch
      %49 = sbr.rel (0) target = $region21
    $region20: #{tpu_custom_call.1} parent=1 // pred_region
      %s51 = ssub.s32 256, 256
      %52 = vsyncadd [#allocation4], %s51
      %s54 = sshll.u32 [#allocation7], 4
      %s55 = int_to_ptr.vmem [resolvable:$true] %s54
      %57 = dma.vmem_to_hbm [thread:$0]  %s55, 256, %s2, [#allocation4]
    $region21: #{tpu_custom_call.1} parent=1 // pred_fallthru
      _
    // Predicated region
    $region22: #{tpu_custom_call.1} parent=1 // pred_check
      _
    $region23: #{tpu_custom_call.1} parent=1 // pred_check_branch
      %59 = sbr.rel (0) target = $region25
    $region24: #{tpu_custom_call.1} parent=1 // pred_region
      %60 = dma.done [#allocation4], 256
    $region25: #{tpu_custom_call.1} parent=1 // pred_fallthru
      _
    %61 = vsyncpa [#allocation3], 1
    %62 = vsyncpa [#allocation6], 1
    %63 = vsyncpa [#allocation4], 1

</llo_original>
